<compile_context>
chip_gen: v7x
topology: tpu7x:2x2x1
jax: 0.10.0
libtpu: 0.0.40
codegen_flags: <defaults>
</compile_context>

<pallas_src>
import functools

import numpy as np
import jax
import jax.numpy as jnp
from jax.experimental import pallas as pl
from jax.experimental.pallas import tpu as pltpu


# ------------------------------- helpers -------------------------------------

def _round_up(x, m):
    return (x + m - 1) // m * m


def _choose_tiling(n, tm, tk):
    """Row tile, K tile and padded N for the adjacency matmul."""
    assert tm % 8 == 0 and tk % 128 == 0 and tk % tm == 0
    base = _round_up(n, 8)
    if base <= tm:                       # tiny graph: a single tile
        return base, base, base
    if base <= tk:                       # medium: row-tiled, single K tile
        n_pad = _round_up(n, tm)
        return tm, n_pad, n_pad
    n_pad = _round_up(n, tk)             # large: fully tiled, streamed adj
    return tm, tk, n_pad


def _layer_norm_masked(h, out_feat, eps):
    """LayerNorm (no affine) over the first `out_feat` columns of a 128-padded
    tile; padded lanes are zero on input and zeroed on output."""
    mask = jax.lax.broadcasted_iota(jnp.int32, h.shape, 1) < out_feat
    inv_n = 1.0 / out_feat
    mean = jnp.sum(jnp.where(mask, h, 0.0), axis=-1, keepdims=True) * inv_n
    c = jnp.where(mask, h - mean, 0.0)
    var = jnp.sum(c * c, axis=-1, keepdims=True) * inv_n
    return c * jax.lax.rsqrt(var + eps)


# ------------------------------- kernels --------------------------------------

def _prep_kernel(fp_ref, wfp_ref, wcat_ref, xfp_ref, x1pre_ref, x2_ref, *, out_pad):
    """Row tile i: x_fp = fp @ W_fp^T and layer-1 x-side matmul
       xc = x_fp @ [W_bd1 | W_loop1] (split at the 128-padded boundary)."""
    x_fp = jnp.dot(fp_ref[...], wfp_ref[...], preferred_element_type=jnp.float32)
    xfp_ref[...] = x_fp.astype(xfp_ref.dtype)
    xc = jnp.dot(x_fp.astype(wcat_ref.dtype), wcat_ref[...],
                 preferred_element_type=jnp.float32)
    x1pre_ref[...] = xc[:, :out_pad].astype(x1pre_ref.dtype)
    x2_ref[...] = xc[:, out_pad:].astype(x2_ref.dtype)


def _spmm_ln_next_kernel(adj_ref, x1pre_ref, x2_ref, wnext_ref,
                         x1n_ref, x2n_ref, acc_ref, *,
                         out_feat, out_pad_next, ln_eps):
    """Tiled adj @ x1_pre with f32 accumulator; at the last K step add the
       self-loop term, LayerNorm, and fuse the NEXT layer's x-side matmul."""
    k = pl.program_id(1)

    @pl.when(k == 0)
    def _():
        acc_ref[...] = jnp.zeros_like(acc_ref)

    acc_ref[...] += jnp.dot(adj_ref[...], x1pre_ref[...],
                            preferred_element_type=jnp.float32)

    @pl.when(k == pl.num_programs(1) - 1)
    def _():
        # (+1e-6 from the reference cancels in the mean subtraction -> omitted)
        h = acc_ref[...] + x2_ref[...].astype(jnp.float32)
        x_norm = _layer_norm_masked(h, out_feat, ln_eps)
        xc = jnp.dot(x_norm.astype(wnext_ref.dtype), wnext_ref[...],
                     preferred_element_type=jnp.float32)
        x1n_ref[...] = xc[:, :out_pad_next].astype(x1n_ref.dtype)
        x2n_ref[...] = xc[:, out_pad_next:].astype(x2n_ref.dtype)


def _spmm_ln_final_kernel(adj_ref, x1pre_ref, x2_ref, out_ref, acc_ref, *,
                          out_feat, ln_eps):
    """Same streamed adj matmul + LayerNorm; writes the module output tile."""
    k = pl.program_id(1)

    @pl.when(k == 0)
    def _():
        acc_ref[...] = jnp.zeros_like(acc_ref)

    acc_ref[...] += jnp.dot(adj_ref[...], x1pre_ref[...],
                            preferred_element_type=jnp.float32)

    @pl.when(k == pl.num_programs(1) - 1)
    def _():
        h = acc_ref[...] + x2_ref[...].astype(jnp.float32)
        out_ref[...] = _layer_norm_masked(h, out_feat, ln_eps).astype(out_ref.dtype)


# -------------------------------- wrapper --------------------------------------

def gnn_based_fp_forward(mat, fp, params, *, compute_dtype=jnp.bfloat16,
                         ln_eps=1e-5, tm=512, tk=1024,
                         vmem_limit_bytes=48 * 1024 * 1024):
    """Forward of gnn_based_fp.  params (unpadded, f32):
         w_fp_t : (fp_dim, h_dim)   -- fp_init weight, transposed
         wbd1   : (h_dim, out_dim)  -- dense block_diag of layer-1 basis weights
         loop1  : (h_dim, out_dim)
         wbd2   : (out_dim, out_dim)
         loop2  : (out_dim, out_dim)
       Returns (x_fp, x) in f32.
    """
    w_fp_t = params["w_fp_t"]
    wbd1, loop1 = params["wbd1"], params["loop1"]
    wbd2, loop2 = params["wbd2"], params["loop2"]

    N = mat.shape[0]
    assert mat.shape[1] == N and fp.shape[0] == N
    F = fp.shape[1]
    H = w_fp_t.shape[1]
    out1 = wbd1.shape[1]
    out2 = wbd2.shape[1]

    H_PAD = _round_up(H, 128)
    O1_PAD = _round_up(out1, 128)
    O2_PAD = _round_up(out2, 128)
    cd = compute_dtype

    # -- pad + pre-cast weights (128-lane-aligned [W_bd | W_loop] boundary) --
    def pad2(w, r, c):
        return jnp.pad(w, ((0, r - w.shape[0]), (0, c - w.shape[1])))

    wfp_p = pad2(w_fp_t, F, H_PAD).astype(cd)
    wcat1 = jnp.concatenate([pad2(wbd1, H_PAD, O1_PAD),
                             pad2(loop1, H_PAD, O1_PAD)], axis=1).astype(cd)
    wcat2 = jnp.concatenate([pad2(wbd2, O1_PAD, O2_PAD),
                             pad2(loop2, O1_PAD, O2_PAD)], axis=1).astype(cd)

    # -- tiling + row padding; pre-cast adj/fp to the (bf16) streaming dtype --
    TM, TK, N_pad = _choose_tiling(N, tm, tk)
    if N_pad != N:
        mat = jnp.pad(mat, ((0, N_pad - N), (0, N_pad - N)))
        fp = jnp.pad(fp, ((0, N_pad - N), (0, 0)))
    adj_p = mat.astype(cd)
    fp_p = fp.astype(cd)

    n_rows = N_pad // TM
    n_k = N_pad // TK

    cparams_prep = pltpu.CompilerParams(
        dimension_semantics=("parallel",), vmem_limit_bytes=vmem_limit_bytes)
    cparams_spmm = pltpu.CompilerParams(
        dimension_semantics=("parallel", "arbitrary"),
        vmem_limit_bytes=vmem_limit_bytes)

    # ---- call 1: x_fp and layer-1 x-side matmul (row-parallel, tiny) ----
    xfp_p, x1pre1, x2_1 = pl.pallas_call(
        functools.partial(_prep_kernel, out_pad=O1_PAD),
        grid=(n_rows,),
        in_specs=[
            pl.BlockSpec((TM, F), lambda i: (i, 0)),
            pl.BlockSpec((F, H_PAD), lambda i: (0, 0)),
            pl.BlockSpec((H_PAD, 2 * O1_PAD), lambda i: (0, 0)),
        ],
        out_specs=(
            pl.BlockSpec((TM, H_PAD), lambda i: (i, 0)),
            pl.BlockSpec((TM, O1_PAD), lambda i: (i, 0)),
            pl.BlockSpec((TM, O1_PAD), lambda i: (i, 0)),
        ),
        out_shape=(
            jax.ShapeDtypeStruct((N_pad, H_PAD), jnp.float32),
            jax.ShapeDtypeStruct((N_pad, O1_PAD), cd),
            jax.ShapeDtypeStruct((N_pad, O1_PAD), cd),
        ),
        compiler_params=cparams_prep,
    )(fp_p, wfp_p, wcat1)

    # ---- call 2: layer 1 (streamed adj + LN, fused layer-2 x-side matmul) ----
    x1pre2, x2_2 = pl.pallas_call(
        functools.partial(_spmm_ln_next_kernel, out_feat=out1,
                          out_pad_next=O2_PAD, ln_eps=ln_eps),
        grid=(n_rows, n_k),
        in_specs=[
            pl.BlockSpec((TM, TK), lambda i, k: (i, k)),        # adj stream
            pl.BlockSpec((TK, O1_PAD), lambda i, k: (k, 0)),    # x1_pre (K side)
            pl.BlockSpec((TM, O1_PAD), lambda i, k: (i, 0)),    # x2 (row side)
            pl.BlockSpec((O1_PAD, 2 * O2_PAD), lambda i, k: (0, 0)),  # next wcat
        ],
        out_specs=(
            pl.BlockSpec((TM, O2_PAD), lambda i, k: (i, 0)),
            pl.BlockSpec((TM, O2_PAD), lambda i, k: (i, 0)),
        ),
        out_shape=(
            jax.ShapeDtypeStruct((N_pad, O2_PAD), cd),
            jax.ShapeDtypeStruct((N_pad, O2_PAD), cd),
        ),
        scratch_shapes=[pltpu.VMEM((TM, O1_PAD), jnp.float32)],
        compiler_params=cparams_spmm,
    )(adj_p, x1pre1, x2_1, wcat2)

    # ---- call 3: layer 2 (streamed adj + LN -> module output) ----
    x_final_p = pl.pallas_call(
        functools.partial(_spmm_ln_final_kernel, out_feat=out2, ln_eps=ln_eps),
        grid=(n_rows, n_k),
        in_specs=[
            pl.BlockSpec((TM, TK), lambda i, k: (i, k)),
            pl.BlockSpec((TK, O2_PAD), lambda i, k: (k, 0)),
            pl.BlockSpec((TM, O2_PAD), lambda i, k: (i, 0)),
        ],
        out_specs=pl.BlockSpec((TM, O2_PAD), lambda i, k: (i, 0)),
        out_shape=jax.ShapeDtypeStruct((N_pad, O2_PAD), jnp.float32),
        scratch_shapes=[pltpu.VMEM((TM, O2_PAD), jnp.float32)],
        compiler_params=cparams_spmm,
    )(adj_p, x1pre2, x2_2)

    return xfp_p[:N, :H], x_final_p[:N, :out2]


# --------------------------- parameter helpers -------------------------------

def xavier_uniform(key, shape, gain):
    # PyTorch convention for 2-D tensors: fan_out = shape[0], fan_in = shape[1]
    fan_out, fan_in = shape[0], shape[1]
    bound = gain * np.sqrt(6.0 / (fan_in + fan_out))
    return jax.random.uniform(key, shape, jnp.float32, -bound, bound)


def build_block_diag(weight_flat, num_base, in_feat, out_feat):
    """weight (1, B*sin*sout) -> dense block-diagonal (in_feat, out_feat)."""
    assert in_feat % num_base == 0 and out_feat % num_base == 0
    sin = in_feat // num_base
    sout = out_feat // num_base
    w = weight_flat.reshape(num_base, sin, sout)
    wbd = jnp.zeros((in_feat, out_feat), jnp.float32)
    for b in range(num_base):
        wbd = wbd.at[b * sin:(b + 1) * sin, b * sout:(b + 1) * sout].set(w[b])
    return wbd


# --------------------------- pure-JAX references ------------------------------

def _ref_node_update(adj, x, w_flat, loop_w, num_base, in_feat, out_feat):
    """Exact PyTorch math (f32, keeps the +1e-6)."""
    sin, sout = in_feat // num_base, out_feat // num_base
    tmp_w = w_flat.reshape(num_base, sin, sout)
    tmp_h = x.reshape(-1, num_base, sin)
    x1 = jnp.einsum('abc,bcd->abd', tmp_h, tmp_w).reshape(-1, out_feat)
    x1 = adj @ x1
    x2 = x @ loop_w
    h = x1 + x2 + 1e-6
    mean = jnp.mean(h, axis=-1, keepdims=True)
    var = jnp.mean(jnp.square(h - mean), axis=-1, keepdims=True)
    return (h - mean) / jnp.sqrt(var + 1e-5)


def _ref_mimic(mat, fp, params, cd, ln_eps=1e-5):
    """Pure-JAX mimic with the same cast points as the kernel's compute path."""
    def dot(a, b):
        return jnp.dot(a.astype(cd), b.astype(cd),
                       preferred_element_type=jnp.float32)

    def ln(h):
        mean = jnp.mean(h, axis=-1, keepdims=True)
        var = jnp.mean(jnp.square(h - mean), axis=-1, keepdims=True)
        return (h - mean) * jax.lax.rsqrt(var + ln_eps)

    x_fp = dot(fp, params["w_fp_t"])
    # layer 1
    x1pre = dot(x_fp, params["wbd1"]).astype(cd)
    x2 = dot(x_fp, params["loop1"]).astype(cd)
    x = ln(dot(mat, x1pre) + x2.astype(jnp.float32))
    # layer 2
    x1pre = dot(x, params["wbd2"]).astype(cd)
    x2 = dot(x, params["loop2"]).astype(cd)
    x = ln(dot(mat, x1pre) + x2.astype(jnp.float32))
    return x_fp, x


# ----------------------------------- main -------------------------------------

if __name__ == "__main__":
    # small shapes consistent with the module
    N, fp_dim, h_dim, out_dim, num_base = 16, 64, 32, 32, 4

    key = jax.random.PRNGKey(0)
    ks = jax.random.split(key, 7)

    mat = jax.random.uniform(ks[0], (N, N), jnp.float32)          # adjacency
    fp = jax.random.normal(ks[1], (N, fp_dim), jnp.float32)       # fingerprints

    gain_relu = float(np.sqrt(2.0))
    w_fp = xavier_uniform(ks[2], (h_dim, fp_dim), 1.0)
    w1_flat = xavier_uniform(
        ks[3], (1, num_base * (h_dim // num_base) * (out_dim // num_base)), gain_relu)
    loop1 = xavier_uniform(ks[4], (h_dim, out_dim), gain_relu)
    w2_flat = xavier_uniform(
        ks[5], (1, num_base * (out_dim // num_base) * (out_dim // num_base)), gain_relu)
    loop2 = xavier_uniform(ks[6], (out_dim, out_dim), gain_relu)

    params = {
        "w_fp_t": jnp.asarray(w_fp.T),                                   # (fp_dim, h_dim)
        "wbd1": build_block_diag(w1_flat, num_base, h_dim, out_dim),     # (h_dim, out_dim)
        "loop1": loop1,
        "wbd2": build_block_diag(w2_flat, num_base, out_dim, out_dim),   # (out_dim, out_dim)
        "loop2": loop2,
    }

    # --- f32 compute path vs exact PyTorch math --------------------------------
    x_fp, x = gnn_based_fp_forward(mat, fp, params, compute_dtype=jnp.float32)
    jax.block_until_ready((x_fp, x))

    x_fp_ref = fp @ w_fp.T
    x_ref = _ref_node_update(mat, x_fp_ref, w1_flat, loop1, num_base, h_dim, out_dim)
    x_ref = _ref_node_update(mat, x_ref, w2_flat, loop2, num_base, out_dim, out_dim)
    np.testing.assert_allclose(np.asarray(x_fp), np.asarray(x_fp_ref),
                               rtol=1e-4, atol=1e-4)
    np.testing.assert_allclose(np.asarray(x), np.asarray(x_ref),
                               rtol=5e-4, atol=5e-4)

    # --- bf16 compute path (default; MXU-native) vs cast-matched mimic ---------
    x_fp_bf, x_bf = gnn_based_fp_forward(mat, fp, params, compute_dtype=jnp.bfloat16)
    jax.block_until_ready((x_fp_bf, x_bf))
    x_fp_m, x_m = _ref_mimic(mat, fp, params, jnp.bfloat16)
    np.testing.assert_allclose(np.asarray(x_fp_bf), np.asarray(x_fp_m),
                               rtol=2e-2, atol=2e-2)
    np.testing.assert_allclose(np.asarray(x_bf), np.asarray(x_m),
                               rtol=2e-2, atol=2e-2)

    # --- multi-tile / padded grid path (exercises the streamed-adj pipeline) ---
    N_big = 1280
    kb = jax.random.split(jax.random.PRNGKey(1), 2)
    mat_big = jax.random.uniform(kb[0], (N_big, N_big), jnp.float32)
    fp_big = jax.random.normal(kb[1], (N_big, fp_dim), jnp.float32)
    x_fp_big, x_big = gnn_based_fp_forward(mat_big, fp_big, params,
                                           compute_dtype=jnp.bfloat16,
                                           tm=256, tk=512)
    jax.block_until_ready((x_fp_big, x_big))
    x_fp_big_ref, x_big_ref = _ref_mimic(mat_big, fp_big, params, jnp.bfloat16)
    np.testing.assert_allclose(np.asarray(x_fp_big), np.asarray(x_fp_big_ref),
                               rtol=2e-2, atol=2e-2)
    np.testing.assert_allclose(np.asarray(x_big), np.asarray(x_big_ref),
                               rtol=2e-2, atol=2e-2)

    print("KERNEL_OK")
</pallas_src>

<mosaic_0001>
module attributes {stable_mosaic.version = 11 : i64} {
  func.func @_prep_kernel(%arg0: i32, %arg1: memref<16x64xf32, #tpu.memory_space<vmem>>, %arg2: memref<64x128xf32, #tpu.memory_space<vmem>>, %arg3: memref<128x256xf32, #tpu.memory_space<vmem>>, %arg4: memref<16x128xf32, #tpu.memory_space<vmem>>, %arg5: memref<16x128xf32, #tpu.memory_space<vmem>>, %arg6: memref<16x128xf32, #tpu.memory_space<vmem>>) attributes {dimension_semantics = [#tpu.dimension_semantics<parallel>], iteration_bounds = array<i64: 1>, scalar_prefetch = 0 : i64, scratch_operands = 0 : i64, tpu.core_type = #tpu.core_type<tc>, window_params = [{transform_indices = @transform_0, window_bounds = array<i64: 16, 64>}, {pipeline_mode = #tpu.pipeline_mode<synchronous>, transform_indices = @transform_1, window_bounds = array<i64: 64, 128>}, {pipeline_mode = #tpu.pipeline_mode<synchronous>, transform_indices = @transform_2, window_bounds = array<i64: 128, 256>}, {transform_indices = @transform_3, window_bounds = array<i64: 16, 128>}, {transform_indices = @transform_4, window_bounds = array<i64: 16, 128>}, {transform_indices = @transform_5, window_bounds = array<i64: 16, 128>}]} {
    %c0 = arith.constant 0 : index
    %c0_0 = arith.constant 0 : index
    %0 = vector.load %arg1[%c0, %c0_0] : memref<16x64xf32, #tpu.memory_space<vmem>>, vector<16x64xf32>
    %c0_1 = arith.constant 0 : index
    %c0_2 = arith.constant 0 : index
    %1 = vector.load %arg2[%c0_1, %c0_2] : memref<64x128xf32, #tpu.memory_space<vmem>>, vector<64x128xf32>
    %cst = arith.constant dense<0.000000e+00> : vector<16x128xf32>
    %2 = tpu.matmul %0, %1, %cst {dimension_numbers = #tpu.dot_dimension_numbers<[1], [0], [0], [1], [0, 0, 1, 1], [], []>} : vector<16x64xf32>, vector<64x128xf32>, vector<16x128xf32> -> vector<16x128xf32>
    %c0_3 = arith.constant 0 : index
    %c0_4 = arith.constant 0 : index
    %3 = vector.load %arg4[%c0_3, %c0_4] : memref<16x128xf32, #tpu.memory_space<vmem>>, vector<16x128xf32>
    tpu.vector_store %arg4[%c0_3, %c0_4], %2 {strides = array<i32>} : memref<16x128xf32, #tpu.memory_space<vmem>>, vector<16x128xf32>,
    %c0_5 = arith.constant 0 : index
    %c0_6 = arith.constant 0 : index
    %4 = vector.load %arg3[%c0_5, %c0_6] : memref<128x256xf32, #tpu.memory_space<vmem>>, vector<128x256xf32>
    %cst_7 = arith.constant dense<0.000000e+00> : vector<16x256xf32>
    %5 = tpu.matmul %2, %4, %cst_7 {dimension_numbers = #tpu.dot_dimension_numbers<[1], [0], [0], [1], [0, 0, 1, 1], [], []>} : vector<16x128xf32>, vector<128x256xf32>, vector<16x256xf32> -> vector<16x256xf32>
    %6 = vector.extract_strided_slice %5 {offsets = [0, 0], sizes = [16, 128], strides = [1, 1]} : vector<16x256xf32> to vector<16x128xf32>
    %c0_8 = arith.constant 0 : index
    %c0_9 = arith.constant 0 : index
    %7 = vector.load %arg5[%c0_8, %c0_9] : memref<16x128xf32, #tpu.memory_space<vmem>>, vector<16x128xf32>
    tpu.vector_store %arg5[%c0_8, %c0_9], %6 {strides = array<i32>} : memref<16x128xf32, #tpu.memory_space<vmem>>, vector<16x128xf32>,
    %8 = vector.extract_strided_slice %5 {offsets = [0, 128], sizes = [16, 128], strides = [1, 1]} : vector<16x256xf32> to vector<16x128xf32>
    %c0_10 = arith.constant 0 : index
    %c0_11 = arith.constant 0 : index
    %9 = vector.load %arg6[%c0_10, %c0_11] : memref<16x128xf32, #tpu.memory_space<vmem>>, vector<16x128xf32>
    tpu.vector_store %arg6[%c0_10, %c0_11], %8 {strides = array<i32>} : memref<16x128xf32, #tpu.memory_space<vmem>>, vector<16x128xf32>,
    return
  }
  func.func @transform_0(%arg0: i32) -> (i32, i32) {
    %c0_i32 = arith.constant 0 : i32
    %c0_i32_0 = arith.constant 0 : i32
    return %arg0, %c0_i32 : i32, i32
  }
  func.func @transform_1(%arg0: i32) -> (i32, i32) {
    %c0_i32 = arith.constant 0 : i32
    %c0_i32_0 = arith.constant 0 : i32
    %c0_i32_1 = arith.constant 0 : i32
    return %c0_i32, %c0_i32_0 : i32, i32
  }
  func.func @transform_2(%arg0: i32) -> (i32, i32) {
    %c0_i32 = arith.constant 0 : i32
    %c0_i32_0 = arith.constant 0 : i32
    %c0_i32_1 = arith.constant 0 : i32
    return %c0_i32, %c0_i32_0 : i32, i32
  }
  func.func @transform_3(%arg0: i32) -> (i32, i32) {
    %c0_i32 = arith.constant 0 : i32
    %c0_i32_0 = arith.constant 0 : i32
    return %arg0, %c0_i32 : i32, i32
  }
  func.func @transform_4(%arg0: i32) -> (i32, i32) {
    %c0_i32 = arith.constant 0 : i32
    %c0_i32_0 = arith.constant 0 : i32
    return %arg0, %c0_i32 : i32, i32
  }
  func.func @transform_5(%arg0: i32) -> (i32, i32) {
    %c0_i32 = arith.constant 0 : i32
    %c0_i32_0 = arith.constant 0 : i32
    return %arg0, %c0_i32 : i32, i32
  }
}

</mosaic_0001>

<llo_original>
// kernel: tpu_custom_call.1
$region0: #{tpu_custom_call.1}
  #allocation0 [shape = 'u32[]', space=smem, size = 0x4, offset = 0x4, fixed_abs, tag = 'smem constant byte address 0x4 - core index']
  #allocation1 [shape = 'u32[144,128]{1,0:T(1,128)}', space=vmem, size = 0x12000, scoped, tag = 'internal scratch']
  %s0 = inlined_call_operand.hbm [shape: f32[16,64], index: 0, kind: input, shape index: {}]
  %s1 = inlined_call_operand.hbm [shape: f32[64,128], index: 1, kind: input, shape index: {}]
  %s2 = inlined_call_operand.hbm [shape: f32[128,256], index: 2, kind: input, shape index: {}]
  %s3 = inlined_call_operand.hbm [shape: f32[16,128], index: 3, kind: output, shape index: {0}]
  %s4 = inlined_call_operand.hbm [shape: f32[16,128], index: 4, kind: output, shape index: {1}]
  %s5 = inlined_call_operand.hbm [shape: f32[16,128], index: 5, kind: output, shape index: {2}]
  %6 = xla_tuple %s3, %s4, %s5
  %s7 = sld [smem:[#allocation0]]
  $region50: #{tpu_custom_call.1} parent=0
    _
  %s9 = ssub.s32 1, %s7
  %s10 = scalar_select 0, %s9, %s7
  $region1: #{tpu_custom_call.1} parent=0
    #allocation2 [shape = 'u8[8192]{0}', space=vmem, size = 0x2000, scoped, tag = 'input window, operand 0, single buffered']
    #allocation3 [shape = 's32[1]{0}', space=sflag, size = 0x4, scoped, tag = 'scoped memory for tpu_custom_call.1']
    #allocation4 [shape = 's32[1]{0}', space=sflag, size = 0x4, scoped, tag = 'scoped memory for tpu_custom_call.1']
    #allocation5 [shape = 'u8[32768]{0}', space=vmem, size = 0x8000, scoped, tag = 'input window, operand 1, single buffered']
    #allocation6 [shape = 's32[1]{0}', space=sflag, size = 0x4, scoped, tag = 'scoped memory for tpu_custom_call.1']
    #allocation7 [shape = 'u8[131072]{0}', space=vmem, size = 0x20000, scoped, tag = 'input window, operand 2, single buffered']
    #allocation8 [shape = 'u8[8192]{0}', space=vmem, size = 0x2000, scoped, tag = 'output window, operand 0, single buffered']
    #allocation9 [shape = 'u8[8192]{0}', space=vmem, size = 0x2000, scoped, tag = 'output window, operand 1, single buffered']
    #allocation10 [shape = 's32[1]{0}', space=sflag, size = 0x4, scoped, tag = 'scoped memory for tpu_custom_call.1']
    #allocation11 [shape = 'u8[8192]{0}', space=vmem, size = 0x2000, scoped, tag = 'output window, operand 2, single buffered']
    %11 = vsyncpa [#allocation3], 0
    %12 = vsyncpa [#allocation6], 0
    %13 = vsyncpa [#allocation4], 0
    %14 = vsyncpa [#allocation10], 0
    // Predicated region
    $region2: #{tpu_custom_call.1} parent=1 // pred_check
      _
    $region3: #{tpu_custom_call.1} parent=1 // pred_check_branch
      %16 = sbr.rel (0) target = $region5
    $region4: #{tpu_custom_call.1} parent=1 // pred_region
      %s18 = ssub.s32 256, 256
      %19 = vsyncadd [#allocation3], %s18
      %s20 = sshll.u32 [#allocation2], 4
      %s21 = int_to_ptr.vmem [resolvable:$true] %s20
      %26 = dma.hbm_to_vmem [thread:$0]  %s0, 256, %s21, [#allocation3], 128, 128, 8
    $region5: #{tpu_custom_call.1} parent=1 // pred_fallthru
      _
    // Predicated region
    $region6: #{tpu_custom_call.1} parent=1 // pred_check
      _
    $region7: #{tpu_custom_call.1} parent=1 // pred_check_branch
      %28 = sbr.rel (0) target = $region9
    $region8: #{tpu_custom_call.1} parent=1 // pred_region
      %s30 = ssub.s32 1024, 1024
      %31 = vsyncadd [#allocation6], %s30
      %s32 = sshll.u32 [#allocation5], 4
      %s33 = int_to_ptr.vmem [resolvable:$true] %s32
      %38 = dma.hbm_to_vmem [thread:$0]  %s1, 1024, %s33, [#allocation6], 128, 128, 8
    $region9: #{tpu_custom_call.1} parent=1 // pred_fallthru
      _
    // Predicated region
    $region10: #{tpu_custom_call.1} parent=1 // pred_check
      _
    $region11: #{tpu_custom_call.1} parent=1 // pred_check_branch
      %40 = sbr.rel (0) target = $region13
    $region12: #{tpu_custom_call.1} parent=1 // pred_region
      %s42 = ssub.s32 4096, 4096
      %43 = vsyncadd [#allocation6], %s42
      %s44 = sshll.u32 [#allocation7], 4
      %s45 = int_to_ptr.vmem [resolvable:$true] %s44
      %50 = dma.hbm_to_vmem [thread:$0]  %s2, 4096, %s45, [#allocation6], 256, 256, 16
    $region13: #{tpu_custom_call.1} parent=1 // pred_fallthru
      _
    // Predicated region
    $region14: #{tpu_custom_call.1} parent=1 // pred_check
      _
    $region15: #{tpu_custom_call.1} parent=1 // pred_check_branch
      %52 = sbr.rel (0) target = $region17
    $region16: #{tpu_custom_call.1} parent=1 // pred_region
      %53 = dma.done [#allocation3], 256
    $region17: #{tpu_custom_call.1} parent=1 // pred_fallthru
      _
    // Predicated region
    $region18: #{tpu_custom_call.1} parent=1 // pred_check
      _
    $region19: #{tpu_custom_call.1} parent=1 // pred_check_branch
      %55 = sbr.rel (0) target = $region21
    $region20: #{tpu_custom_call.1} parent=1 // pred_region
      %56 = dma.done [#allocation6], 1024
    $region21: #{tpu_custom_call.1} parent=1 // pred_fallthru
      _
    // Predicated region
    $region22: #{tpu_custom_call.1} parent=1 // pred_check
      _
    $region23: #{tpu_custom_call.1} parent=1 // pred_check_branch
      %58 = sbr.rel (0) target = $region25
    $region24: #{tpu_custom_call.1} parent=1 // pred_region
      %59 = dma.done [#allocation6], 4096
    $region25: #{tpu_custom_call.1} parent=1 // pred_fallthru
      _
    %v60 = vld [vmem:[#allocation2] sm:$0xff]
    %v61 = vld [vmem:[#allocation2 + $0x8] sm:$0xff]
    %v62 = vld [vmem:[#allocation5] sm:$0xff]
    %v63 = vld [vmem:[#allocation5 + $0x8] sm:$0xff]
    %v64 = vld [vmem:[#allocation5 + $0x10] sm:$0xff]
    %v65 = vld [vmem:[#allocation5 + $0x18] sm:$0xff]
    %v66 = vld [vmem:[#allocation5 + $0x20] sm:$0xff]
    %v67 = vld [vmem:[#allocation5 + $0x28] sm:$0xff]
    %v68 = vld [vmem:[#allocation5 + $0x30] sm:$0xff]
    %v69 = vld [vmem:[#allocation5 + $0x38] sm:$0xff]
    %vm70 = vcmask 523264
    %v72 = vsel %vm70, %v60, 0
    %v75 = vsel %vm70, %v61, 0
    %77 = vmatprep.subr.mxu0 0.0
    %78 = vmatpush1.msra.mxu0 %v62
    %79 = vmatprep.subr.mxu0 0.0
    %80 = vmatpush1.msra.mxu0 %v63
    %81 = vmatprep.subr.mxu0 0.0
    %82 = vmatpush1.msra.mxu0 %v64
    %83 = vmatprep.subr.mxu0 0.0
    %84 = vmatpush1.msra.mxu0 %v65
    %85 = vmatprep.subr.mxu0 0.0
    %86 = vmatpush1.msra.mxu0 %v66
    %87 = vmatprep.subr.mxu0 0.0
    %88 = vmatpush1.msra.mxu0 %v67
    %89 = vmatprep.subr.mxu0 0.0
    %90 = vmatpush1.msra.mxu0 %v68
    %91 = vmatprep.subr.mxu0 0.0
    %92 = vmatpush1.msra.mxu0 %v69
    %93 = vmatprep.subr.mxu0 0.0
    %94 = vmatpush1.msra.mxu0 0.0
    %95 = vmatprep.subr.mxu0 0.0
    %96 = vmatpush1.msra.mxu0 0.0
    %97 = vmatprep.subr.mxu0 0.0
    %98 = vmatpush1.msra.mxu0 0.0
    %99 = vmatprep.subr.mxu0 0.0
    %100 = vmatpush1.msra.mxu0 0.0
    %101 = vmatprep.subr.mxu0 0.0
    %102 = vmatpush1.msra.mxu0 0.0
    %103 = vmatprep.subr.mxu0 0.0
    %104 = vmatpush1.msra.mxu0 0.0
    %105 = vmatprep.subr.mxu0 0.0
    %106 = vmatpush1.msra.mxu0 0.0
    %107 = vmatprep.subr.mxu0 0.0
    %108 = vmatpush1.msra.mxu0 0.0
    %109 = vmatprep.subr.mxu0 0.0
    %110 = vmatpush1.msra.mxu0 0.0
    %111 = vmatprep.subr.mxu0 0.0
    %112 = vmatpush1.msra.mxu0 0.0
    %113 = vmatprep.subr.mxu0 0.0
    %114 = vmatpush1.msra.mxu0 0.0
    %115 = vmatprep.subr.mxu0 0.0
    %116 = vmatpush1.msra.mxu0 0.0
    %117 = vmatprep.subr.mxu0 0.0
    %118 = vmatpush1.msra.mxu0 0.0
    %119 = vmatprep.subr.mxu0 0.0
    %120 = vmatpush1.msra.mxu0 0.0
    %121 = vmatprep.subr.mxu0 0.0
    %122 = vmatpush1.msra.mxu0 0.0
    %123 = vmatprep.subr.mxu0 0.0
    %124 = vmatpush1.msra.mxu0 0.0
    %125 = vmatprep.subr.mxu0 0.0
    %126 = vmatpush1.msra.mxu0 0.0
    %127 = vmatprep.subr.mxu0 0.0
    %128 = vmatpush1.msra.mxu0 0.0
    %129 = vmatprep.subr.mxu0 0.0
    %130 = vmatpush1.msra.mxu0 0.0
    %131 = vmatprep.subr.mxu0 0.0
    %132 = vmatpush1.msra.mxu0 0.0
    %133 = vmatprep.subr.mxu0 0.0
    %134 = vmatpush1.msra.mxu0 0.0
    %135 = vmatprep.subr.mxu0 0.0
    %136 = vmatpush1.msra.mxu0 0.0
    %137 = vmatprep.subr.mxu0 0.0
    %138 = vmatpush1.msra.mxu0 0.0
    %139 = vmatprep.subr.mxu0 0.0
    %140 = vmatpush1.msra.mxu0 0.0
    %141 = vmatprep.mubr.f32.mxu0 0.0
    %142 = vmatmul.mubr.f32.gmra.mrb[0].mxu0 %v72
    %v143 = vpop.f32.mrb[0].mxu0
    %v144 = vadd.f32 0.0, %v143
    %v145 = vpop.f32.mrb[0].mxu0
    %146 = vmatprep.mubr.f32.mxu0 0.0
    %147 = vmatmul.mubr.f32.gmra.mrb[0].mxu0 %v75
    %v148 = vpop.f32.mrb[0].mxu0
    %v149 = vadd.f32 0.0, %v148
    %v150 = vpop.f32.mrb[0].mxu0
    %151 = vdwg.mxu0
    %152 = vst [vmem:[#allocation8] sm:$0xff] %v144
    %153 = vst [vmem:[#allocation8 + $0x8] sm:$0xff] %v149
    %v154 = vld [vmem:[#allocation7] sm:$0xff]
    %v155 = vld [vmem:[#allocation7 + $0x8] sm:$0xff]
    %v156 = vld [vmem:[#allocation7 + $0x10] sm:$0xff]
    %v157 = vld [vmem:[#allocation7 + $0x18] sm:$0xff]
    %v158 = vld [vmem:[#allocation7 + $0x20] sm:$0xff]
    %v159 = vld [vmem:[#allocation7 + $0x28] sm:$0xff]
    %v160 = vld [vmem:[#allocation7 + $0x30] sm:$0xff]
    %v161 = vld [vmem:[#allocation7 + $0x38] sm:$0xff]
    %v162 = vld [vmem:[#allocation7 + $0x40] sm:$0xff]
    %v163 = vld [vmem:[#allocation7 + $0x48] sm:$0xff]
    %v164 = vld [vmem:[#allocation7 + $0x50] sm:$0xff]
    %v165 = vld [vmem:[#allocation7 + $0x58] sm:$0xff]
    %v166 = vld [vmem:[#allocation7 + $0x60] sm:$0xff]
    %v167 = vld [vmem:[#allocation7 + $0x68] sm:$0xff]
    %v168 = vld [vmem:[#allocation7 + $0x70] sm:$0xff]
    %v169 = vld [vmem:[#allocation7 + $0x78] sm:$0xff]
    %v170 = vld [vmem:[#allocation7 + $0x80] sm:$0xff]
    %v171 = vld [vmem:[#allocation7 + $0x88] sm:$0xff]
    %v172 = vld [vmem:[#allocation7 + $0x90] sm:$0xff]
    %v173 = vld [vmem:[#allocation7 + $0x98] sm:$0xff]
    %v174 = vld [vmem:[#allocation7 + $0xa0] sm:$0xff]
    %v175 = vld [vmem:[#allocation7 + $0xa8] sm:$0xff]
    %v176 = vld [vmem:[#allocation7 + $0xb0] sm:$0xff]
    %v177 = vld [vmem:[#allocation7 + $0xb8] sm:$0xff]
    %v178 = vld [vmem:[#allocation7 + $0xc0] sm:$0xff]
    %v179 = vld [vmem:[#allocation7 + $0xc8] sm:$0xff]
    %v180 = vld [vmem:[#allocation7 + $0xd0] sm:$0xff]
    %v181 = vld [vmem:[#allocation7 + $0xd8] sm:$0xff]
    %v182 = vld [vmem:[#allocation7 + $0xe0] sm:$0xff]
    %v183 = vld [vmem:[#allocation7 + $0xe8] sm:$0xff]
    %v184 = vld [vmem:[#allocation7 + $0xf0] sm:$0xff]
    %v185 = vld [vmem:[#allocation7 + $0xf8] sm:$0xff]
    %186 = vmatprep.subr.mxu0 %v155
    %187 = vmatpush1.msra.mxu0 %v154
    %188 = vmatprep.subr.mxu0 %v157
    %189 = vmatpush1.msra.mxu0 %v156
    %190 = vmatprep.subr.mxu0 %v159
    %191 = vmatpush1.msra.mxu0 %v158
    %192 = vmatprep.subr.mxu0 %v161
    %193 = vmatpush1.msra.mxu0 %v160
    %194 = vmatprep.subr.mxu0 %v163
    %195 = vmatpush1.msra.mxu0 %v162
    %196 = vmatprep.subr.mxu0 %v165
    %197 = vmatpush1.msra.mxu0 %v164
    %198 = vmatprep.subr.mxu0 %v167
    %199 = vmatpush1.msra.mxu0 %v166
    %200 = vmatprep.subr.mxu0 %v169
    %201 = vmatpush1.msra.mxu0 %v168
    %202 = vmatprep.subr.mxu0 %v171
    %203 = vmatpush1.msra.mxu0 %v170
    %204 = vmatprep.subr.mxu0 %v173
    %205 = vmatpush1.msra.mxu0 %v172
    %206 = vmatprep.subr.mxu0 %v175
    %207 = vmatpush1.msra.mxu0 %v174
    %208 = vmatprep.subr.mxu0 %v177
    %209 = vmatpush1.msra.mxu0 %v176
    %210 = vmatprep.subr.mxu0 %v179
    %211 = vmatpush1.msra.mxu0 %v178
    %212 = vmatprep.subr.mxu0 %v181
    %213 = vmatpush1.msra.mxu0 %v180
    %214 = vmatprep.subr.mxu0 %v183
    %215 = vmatpush1.msra.mxu0 %v182
    %216 = vmatprep.subr.mxu0 %v185
    %217 = vmatpush1.msra.mxu0 %v184
    %218 = vmatprep.subr.mxu0 0.0
    %219 = vmatpush1.msra.mxu0 0.0
    %220 = vmatprep.subr.mxu0 0.0
    %221 = vmatpush1.msra.mxu0 0.0
    %222 = vmatprep.subr.mxu0 0.0
    %223 = vmatpush1.msra.mxu0 0.0
    %224 = vmatprep.subr.mxu0 0.0
    %225 = vmatpush1.msra.mxu0 0.0
    %226 = vmatprep.subr.mxu0 0.0
    %227 = vmatpush1.msra.mxu0 0.0
    %228 = vmatprep.subr.mxu0 0.0
    %229 = vmatpush1.msra.mxu0 0.0
    %230 = vmatprep.subr.mxu0 0.0
    %231 = vmatpush1.msra.mxu0 0.0
    %232 = vmatprep.subr.mxu0 0.0
    %233 = vmatpush1.msra.mxu0 0.0
    %234 = vmatprep.subr.mxu0 0.0
    %235 = vmatpush1.msra.mxu0 0.0
    %236 = vmatprep.subr.mxu0 0.0
    %237 = vmatpush1.msra.mxu0 0.0
    %238 = vmatprep.subr.mxu0 0.0
    %239 = vmatpush1.msra.mxu0 0.0
    %240 = vmatprep.subr.mxu0 0.0
    %241 = vmatpush1.msra.mxu0 0.0
    %242 = vmatprep.subr.mxu0 0.0
    %243 = vmatpush1.msra.mxu0 0.0
    %244 = vmatprep.subr.mxu0 0.0
    %245 = vmatpush1.msra.mxu0 0.0
    %246 = vmatprep.subr.mxu0 0.0
    %247 = vmatpush1.msra.mxu0 0.0
    %248 = vmatprep.subr.mxu0 0.0
    %249 = vmatpush1.msra.mxu0 0.0
    %250 = vmatprep.mubr.f32.mxu0 0.0
    %251 = vmatmul.mubr.f32.gmra.mrb[0].mxu0 %v144
    %v252 = vpop.f32.mrb[0].mxu0
    %v253 = vadd.f32 0.0, %v252
    %v254 = vpop.f32.mrb[0].mxu0
    %v255 = vadd.f32 0.0, %v254
    %256 = vmatprep.mubr.f32.mxu0 0.0
    %257 = vmatmul.mubr.f32.gmra.mrb[0].mxu0 %v149
    %v258 = vpop.f32.mrb[0].mxu0
    %v259 = vadd.f32 0.0, %v258
    %v260 = vpop.f32.mrb[0].mxu0
    %v261 = vadd.f32 0.0, %v260
    %262 = vdwg.mxu0
    %263 = vst [vmem:[#allocation9] sm:$0xff] %v253
    %264 = vst [vmem:[#allocation9 + $0x8] sm:$0xff] %v259
    %265 = vst [vmem:[#allocation11] sm:$0xff] %v255
    %266 = vst [vmem:[#allocation11 + $0x8] sm:$0xff] %v261
    // Predicated region
    $region26: #{tpu_custom_call.1} parent=1 // pred_check
      _
    $region27: #{tpu_custom_call.1} parent=1 // pred_check_branch
      %268 = sbr.rel (0) target = $region29
    $region28: #{tpu_custom_call.1} parent=1 // pred_region
      %s270 = ssub.s32 256, 256
      %271 = vsyncadd [#allocation4], %s270
      %s272 = sshll.u32 [#allocation8], 4
      %s273 = int_to_ptr.vmem [resolvable:$true] %s272
      %278 = dma.vmem_to_hbm [thread:$0]  %s273, 256, %s3, [#allocation4], 128, 128, 8
    $region29: #{tpu_custom_call.1} parent=1 // pred_fallthru
      _
    // Predicated region
    $region30: #{tpu_custom_call.1} parent=1 // pred_check
      _
    $region31: #{tpu_custom_call.1} parent=1 // pred_check_branch
      %280 = sbr.rel (0) target = $region33
    $region32: #{tpu_custom_call.1} parent=1 // pred_region
      %s282 = ssub.s32 256, 256
      %283 = vsyncadd [#allocation10], %s282
      %s284 = sshll.u32 [#allocation9], 4
      %s285 = int_to_ptr.vmem [resolvable:$true] %s284
      %290 = dma.vmem_to_hbm [thread:$0]  %s285, 256, %s4, [#allocation10], 128, 128, 8
    $region33: #{tpu_custom_call.1} parent=1 // pred_fallthru
      _
    // Predicated region
    $region34: #{tpu_custom_call.1} parent=1 // pred_check
      _
    $region35: #{tpu_custom_call.1} parent=1 // pred_check_branch
      %292 = sbr.rel (0) target = $region37
    $region36: #{tpu_custom_call.1} parent=1 // pred_region
      %s294 = ssub.s32 256, 256
      %295 = vsyncadd [#allocation10], %s294
      %s296 = sshll.u32 [#allocation11], 4
      %s297 = int_to_ptr.vmem [resolvable:$true] %s296
      %302 = dma.vmem_to_hbm [thread:$0]  %s297, 256, %s5, [#allocation10], 128, 128, 8
    $region37: #{tpu_custom_call.1} parent=1 // pred_fallthru
      _
    // Predicated region
    $region38: #{tpu_custom_call.1} parent=1 // pred_check
      _
    $region39: #{tpu_custom_call.1} parent=1 // pred_check_branch
      %304 = sbr.rel (0) target = $region41
    $region40: #{tpu_custom_call.1} parent=1 // pred_region
      %305 = dma.done [#allocation4], 256
    $region41: #{tpu_custom_call.1} parent=1 // pred_fallthru
      _
    // Predicated region
    $region42: #{tpu_custom_call.1} parent=1 // pred_check
      _
    $region43: #{tpu_custom_call.1} parent=1 // pred_check_branch
      %307 = sbr.rel (0) target = $region45
    $region44: #{tpu_custom_call.1} parent=1 // pred_region
      %308 = dma.done [#allocation10], 256
    $region45: #{tpu_custom_call.1} parent=1 // pred_fallthru
      _
    // Predicated region
    $region46: #{tpu_custom_call.1} parent=1 // pred_check
      _
    $region47: #{tpu_custom_call.1} parent=1 // pred_check_branch
      %310 = sbr.rel (0) target = $region49
    $region48: #{tpu_custom_call.1} parent=1 // pred_region
      %311 = dma.done [#allocation10], 256
    $region49: #{tpu_custom_call.1} parent=1 // pred_fallthru
      _
    %312 = vsyncpa [#allocation3], 1
    %313 = vsyncpa [#allocation6], 1
    %314 = vsyncpa [#allocation4], 1
    %315 = vsyncpa [#allocation10], 1

</llo_original>
